<compile_context>
chip_gen: v7x
topology: tpu7x:2x2x1
jax: 0.10.0
libtpu: 0.0.40
codegen_flags: <defaults>
</compile_context>

<pallas_src>
import functools

import jax
import jax.numpy as jnp
from jax.experimental import pallas as pl
from jax.experimental.pallas import tpu as pltpu


def _sepconv_kernel(x_ref, wd_ref, wbd_ref, o_ref, *, kernel_size, padding, l_out):
    # x_ref  : (nb*C_in,  L_in)        collapsed (batch, channel) rows of x
    # wd_ref : (nb*C_in,  K)           row-expanded depthwise weights
    # wbd_ref: (nb*C_out, nb*C_in)     block-diagonal pointwise weights
    # o_ref  : (nb*C_out, L_out)       collapsed output rows
    rows_in, l_in = x_ref.shape

    x = x_ref[...].astype(jnp.float32)                       # (nb*C_in, L_in)

    # Conv zero boundary built in-register (one concatenate): no halo scratch,
    # no scratch zero-fill, no lane-unaligned VMEM slices per tap.
    if padding > 0:
        halo = jnp.zeros((rows_in, padding), dtype=jnp.float32)
        xw = jnp.concatenate([halo, x, halo], axis=1)         # (rows, L_in + 2p)
    else:
        xw = x

    # Depthwise conv: K shifted in-register slices with per-row (= per-channel)
    # scalar weights, f32 accumulation on the VPU (full-sublane vregs).
    wd = wd_ref[...].astype(jnp.float32)                      # (nb*C_in, K)
    acc = xw[:, 0:l_out] * wd[:, 0:1]
    for k in range(1, kernel_size):
        acc = acc + xw[:, k:k + l_out] * wd[:, k:k + 1]

    # Pointwise 1x1 conv: one flat 2-D matmul on the (otherwise idle) MXU.
    # wbd = kron(I_nb, W_point) is block-diagonal, so this performs the whole
    # batch-block's channel contraction in a single dot, f32 accumulation.
    wbd = wbd_ref[...].astype(jnp.float32)                    # (nb*C_out, nb*C_in)
    out = jnp.dot(wbd, acc, preferred_element_type=jnp.float32)

    o_ref[...] = out.astype(o_ref.dtype)                      # true-L_out store


def _block_vmem_bytes(nb, c_in, c_out, l_in, l_out, padding, itemsize):
    rows_in, rows_out = nb * c_in, nb * c_out
    w_work = l_in + 2 * padding
    return (2 * rows_in * l_in * itemsize        # double-buffered x block
            + 2 * rows_out * l_out * itemsize    # double-buffered out block
            + rows_in * (w_work + l_out) * 4     # xw + acc f32 working values
            + rows_out * l_out * 4               # matmul result
            + rows_out * rows_in * 4             # block-diag pointwise weights
            + rows_in * 128 * 4)                 # depthwise weights (lane-padded)


def _pick_batch_block(n, c_in, c_out, l_in, l_out, padding, itemsize,
                      batch_block=None, vmem_budget=12 * 1024 * 1024):
    """Batches per grid step.  Candidates are divisors of N whose collapsed row
    counts are sublane (8) aligned or cover the whole array; prefer (a) a
    bounded block-diagonal matmul, (b) fitting the VMEM budget, (c) >= 2 grid
    steps for pipelining / megacore."""
    aligned = [d for d in range(1, n + 1)
               if n % d == 0
               and ((d * c_in) % 8 == 0 or d == n)
               and ((d * c_out) % 8 == 0 or d == n)]
    capped = [d for d in aligned
              if d == 1 or (d * c_in <= 128 and d * c_out <= 128)]
    cands = capped or aligned                                  # never empty (n is aligned)
    if batch_block is not None:
        ok = [d for d in cands if d <= batch_block]
        return max(ok) if ok else min(cands)
    fit = [d for d in cands
           if _block_vmem_bytes(d, c_in, c_out, l_in, l_out, padding, itemsize)
           <= vmem_budget] or [min(cands)]
    multi = [d for d in fit if n // d >= 2]
    return max(multi) if multi else max(fit)


def separable_conv1d(x, w_depth, w_point, *, padding=0, batch_block=None):
    """x: (N, C_in, L); w_depth: (C_in, 1, K) (PyTorch depthwise layout);
    w_point: (C_out, C_in, 1).  Returns (N, C_out, L_out), matching
    nn.Conv1d(groups=C_in) followed by nn.Conv1d(kernel_size=1), bias=False."""
    n, c_in, l_in = x.shape
    k = w_depth.shape[-1]
    c_out = w_point.shape[0]
    l_out = l_in + 2 * padding - k + 1
    assert l_out > 0, "invalid conv geometry"

    wd = w_depth[:, 0, :]                                      # (C_in, K)
    wp = w_point[:, :, 0]                                      # (C_out, C_in)

    nb = _pick_batch_block(n, c_in, c_out, l_in, l_out, padding,
                           x.dtype.itemsize, batch_block)
    rows_in, rows_out = nb * c_in, nb * c_out
    grid = (n // nb,)

    # Row-expanded depthwise taps (row r of a block is channel r % C_in) and
    # block-diagonal pointwise weights: the kernel stays fully 2-D with packed
    # sublanes and needs no in-kernel reshape.  Both arrays are tiny.
    wd_rows = jnp.tile(wd, (nb, 1))                            # (nb*C_in, K)
    w_bd = jnp.kron(jnp.eye(nb, dtype=wp.dtype), wp)           # (nb*C_out, nb*C_in)

    x2 = x.reshape(n * c_in, l_in)                             # free leading-dim merge

    flops = 2 * n * l_out * c_in * (k + c_out)
    bytes_accessed = (x2.size * x2.dtype.itemsize
                      + wd_rows.size * wd_rows.dtype.itemsize
                      + w_bd.size * w_bd.dtype.itemsize
                      + n * c_out * l_out * x.dtype.itemsize)

    kernel = functools.partial(_sepconv_kernel, kernel_size=k,
                               padding=padding, l_out=l_out)

    out2 = pl.pallas_call(
        kernel,
        out_shape=jax.ShapeDtypeStruct((n * c_out, l_out), x.dtype),
        grid_spec=pltpu.PrefetchScalarGridSpec(
            num_scalar_prefetch=0,
            grid=grid,
            in_specs=[
                pl.BlockSpec((rows_in, l_in), lambda b: (b, 0)),
                pl.BlockSpec((rows_in, k), lambda b: (0, 0)),
                pl.BlockSpec((rows_out, rows_in), lambda b: (0, 0)),
            ],
            out_specs=pl.BlockSpec((rows_out, l_out), lambda b: (b, 0)),
        ),
        compiler_params=pltpu.CompilerParams(
            dimension_semantics=("parallel",),
            vmem_limit_bytes=64 * 1024 * 1024),
        cost_estimate=pl.CostEstimate(flops=flops, transcendentals=0,
                                      bytes_accessed=bytes_accessed),
    )(x2, wd_rows, w_bd)

    return out2.reshape(n, c_out, l_out)                       # free leading-dim split


def _reference(x, w_depth, w_point, *, padding):
    """Pure-JAX reference matching PyTorch Conv1d semantics (bias=False)."""
    n, c_in, l = x.shape
    k = w_depth.shape[-1]
    l_out = l + 2 * padding - k + 1
    xp = jnp.pad(x, ((0, 0), (0, 0), (padding, padding))).astype(jnp.float32)
    wd = w_depth[:, 0, :].astype(jnp.float32)                  # (C_in, K)
    dw = jnp.zeros((n, c_in, l_out), dtype=jnp.float32)
    for j in range(k):
        dw = dw + xp[:, :, j:j + l_out] * wd[None, :, j:j + 1]
    wp = w_point[:, :, 0].astype(jnp.float32)                  # (C_out, C_in)
    out = jnp.einsum("oc,ncl->nol", wp, dw,
                     precision=jax.lax.Precision.HIGHEST)
    return out.astype(x.dtype)


if __name__ == "__main__":
    # Module config: SeparableConv1d(in_channels=4, out_channels=8,
    #                                kernel_size=3, padding=1)
    N, C_IN, C_OUT, L, K, PAD = 2, 4, 8, 16, 3, 1

    key = jax.random.PRNGKey(0)
    kx, kd, kp = jax.random.split(key, 3)
    x = jax.random.normal(kx, (N, C_IN, L), dtype=jnp.float32)
    # PyTorch layouts: depthwise (C_in, 1, K), pointwise (C_out, C_in, 1)
    w_depth = jax.random.normal(kd, (C_IN, 1, K), dtype=jnp.float32) * 0.1
    w_point = jax.random.normal(kp, (C_OUT, C_IN, 1), dtype=jnp.float32) * 0.1

    out = separable_conv1d(x, w_depth, w_point, padding=PAD)
    out = jax.block_until_ready(out)

    ref = _reference(x, w_depth, w_point, padding=PAD)
    assert out.shape == (N, C_OUT, L + 2 * PAD - K + 1), "bad output shape"
    # Tolerance covers MXU f32 matmul precision differences vs the XLA einsum;
    # any logic error (wrong tap/channel mapping) is orders of magnitude larger.
    if not jnp.allclose(out, ref, atol=1e-3, rtol=1e-2):
        max_err = float(jnp.max(jnp.abs(out - ref)))
        raise AssertionError(f"mismatch vs reference, max abs err = {max_err}")

    print("KERNEL_OK")
</pallas_src>

<mosaic_0001>
module attributes {stable_mosaic.version = 11 : i64} {
  func.func @_sepconv_kernel(%arg0: i32, %arg1: memref<8x16xf32, #tpu.memory_space<vmem>>, %arg2: memref<8x3xf32, #tpu.memory_space<vmem>>, %arg3: memref<16x8xf32, #tpu.memory_space<vmem>>, %arg4: memref<16x16xf32, #tpu.memory_space<vmem>>) attributes {dimension_semantics = [#tpu.dimension_semantics<parallel>], iteration_bounds = array<i64: 1>, scalar_prefetch = 0 : i64, scratch_operands = 0 : i64, tpu.core_type = #tpu.core_type<tc>, window_params = [{transform_indices = @transform_0, window_bounds = array<i64: 8, 16>}, {pipeline_mode = #tpu.pipeline_mode<synchronous>, transform_indices = @transform_1, window_bounds = array<i64: 8, 3>}, {pipeline_mode = #tpu.pipeline_mode<synchronous>, transform_indices = @transform_2, window_bounds = array<i64: 16, 8>}, {transform_indices = @transform_3, window_bounds = array<i64: 16, 16>}]} {
    %c0 = arith.constant 0 : index
    %c0_0 = arith.constant 0 : index
    %0 = vector.load %arg1[%c0, %c0_0] : memref<8x16xf32, #tpu.memory_space<vmem>>, vector<8x16xf32>
    %cst = arith.constant 0.000000e+00 : f32
    %1 = vector.broadcast %cst : f32 to vector<8x1xf32>
    %2 = tpu.concatenate %1, %0, %1 in 1 : vector<8x1xf32>, vector<8x16xf32>, vector<8x1xf32> -> vector<8x18xf32>
    %c0_1 = arith.constant 0 : index
    %c0_2 = arith.constant 0 : index
    %3 = vector.load %arg2[%c0_1, %c0_2] : memref<8x3xf32, #tpu.memory_space<vmem>>, vector<8x3xf32>
    %4 = vector.extract_strided_slice %2 {offsets = [0, 0], sizes = [8, 16], strides = [1, 1]} : vector<8x18xf32> to vector<8x16xf32>
    %5 = vector.extract_strided_slice %3 {offsets = [0, 0], sizes = [8, 1], strides = [1, 1]} : vector<8x3xf32> to vector<8x1xf32>
    %6 = vector.broadcast %5 : vector<8x1xf32> to vector<8x16xf32>
    %7 = arith.mulf %4, %6 : vector<8x16xf32>
    %8 = vector.extract_strided_slice %2 {offsets = [0, 1], sizes = [8, 16], strides = [1, 1]} : vector<8x18xf32> to vector<8x16xf32>
    %9 = vector.extract_strided_slice %3 {offsets = [0, 1], sizes = [8, 1], strides = [1, 1]} : vector<8x3xf32> to vector<8x1xf32>
    %10 = vector.broadcast %9 : vector<8x1xf32> to vector<8x16xf32>
    %11 = arith.mulf %8, %10 : vector<8x16xf32>
    %12 = arith.addf %7, %11 : vector<8x16xf32>
    %13 = vector.extract_strided_slice %2 {offsets = [0, 2], sizes = [8, 16], strides = [1, 1]} : vector<8x18xf32> to vector<8x16xf32>
    %14 = vector.extract_strided_slice %3 {offsets = [0, 2], sizes = [8, 1], strides = [1, 1]} : vector<8x3xf32> to vector<8x1xf32>
    %15 = vector.broadcast %14 : vector<8x1xf32> to vector<8x16xf32>
    %16 = arith.mulf %13, %15 : vector<8x16xf32>
    %17 = arith.addf %12, %16 : vector<8x16xf32>
    %c0_3 = arith.constant 0 : index
    %c0_4 = arith.constant 0 : index
    %18 = vector.load %arg3[%c0_3, %c0_4] : memref<16x8xf32, #tpu.memory_space<vmem>>, vector<16x8xf32>
    %cst_5 = arith.constant dense<0.000000e+00> : vector<16x16xf32>
    %19 = tpu.matmul %18, %17, %cst_5 {dimension_numbers = #tpu.dot_dimension_numbers<[1], [0], [0], [1], [0, 0, 1, 1], [], []>} : vector<16x8xf32>, vector<8x16xf32>, vector<16x16xf32> -> vector<16x16xf32>
    %c0_6 = arith.constant 0 : index
    %c0_7 = arith.constant 0 : index
    %20 = vector.load %arg4[%c0_6, %c0_7] : memref<16x16xf32, #tpu.memory_space<vmem>>, vector<16x16xf32>
    tpu.vector_store %arg4[%c0_6, %c0_7], %19 {strides = array<i32>} : memref<16x16xf32, #tpu.memory_space<vmem>>, vector<16x16xf32>,
    return
  }
  func.func @transform_0(%arg0: i32) -> (i32, i32) {
    %c0_i32 = arith.constant 0 : i32
    %c0_i32_0 = arith.constant 0 : i32
    return %arg0, %c0_i32 : i32, i32
  }
  func.func @transform_1(%arg0: i32) -> (i32, i32) {
    %c0_i32 = arith.constant 0 : i32
    %c0_i32_0 = arith.constant 0 : i32
    %c0_i32_1 = arith.constant 0 : i32
    return %c0_i32, %c0_i32_0 : i32, i32
  }
  func.func @transform_2(%arg0: i32) -> (i32, i32) {
    %c0_i32 = arith.constant 0 : i32
    %c0_i32_0 = arith.constant 0 : i32
    %c0_i32_1 = arith.constant 0 : i32
    return %c0_i32, %c0_i32_0 : i32, i32
  }
  func.func @transform_3(%arg0: i32) -> (i32, i32) {
    %c0_i32 = arith.constant 0 : i32
    %c0_i32_0 = arith.constant 0 : i32
    return %arg0, %c0_i32 : i32, i32
  }
}

</mosaic_0001>

<llo_original>
// kernel: tpu_custom_call.1
$region0: #{tpu_custom_call.1}
  #allocation0 [shape = 'u32[]', space=smem, size = 0x4, offset = 0x4, fixed_abs, tag = 'smem constant byte address 0x4 - core index']
  #allocation1 [shape = 'u32[144,128]{1,0:T(1,128)}', space=vmem, size = 0x12000, scoped, tag = 'internal scratch']
  %s0 = inlined_call_operand.hbm [shape: f32[8,16], index: 0, kind: input, shape index: {}]
  %s1 = inlined_call_operand.hbm [shape: f32[8,3], index: 1, kind: input, shape index: {}]
  %s2 = inlined_call_operand.hbm [shape: f32[16,8], index: 2, kind: input, shape index: {}]
  %s3 = inlined_call_operand.hbm [shape: f32[16,16], index: 3, kind: output, shape index: {}]
  %s4 = sld [smem:[#allocation0]]
  $region34: #{tpu_custom_call.1} parent=0
    _
  %s6 = ssub.s32 1, %s4
  %s7 = scalar_select 0, %s6, %s4
  $region1: #{tpu_custom_call.1} parent=0
    #allocation2 [shape = 'u8[4096]{0}', space=vmem, size = 0x1000, scoped, tag = 'input window, operand 0, single buffered']
    #allocation3 [shape = 's32[1]{0}', space=sflag, size = 0x4, scoped, tag = 'scoped memory for tpu_custom_call.1']
    #allocation4 [shape = 's32[1]{0}', space=sflag, size = 0x4, scoped, tag = 'scoped memory for tpu_custom_call.1']
    #allocation5 [shape = 'u8[4096]{0}', space=vmem, size = 0x1000, scoped, tag = 'input window, operand 1, single buffered']
    #allocation6 [shape = 's32[1]{0}', space=sflag, size = 0x4, scoped, tag = 'scoped memory for tpu_custom_call.1']
    #allocation7 [shape = 'u8[8192]{0}', space=vmem, size = 0x2000, scoped, tag = 'input window, operand 2, single buffered']
    #allocation8 [shape = 'u8[8192]{0}', space=vmem, size = 0x2000, scoped, tag = 'output window, operand 0, single buffered']
    %8 = vsyncpa [#allocation3], 0
    %9 = vsyncpa [#allocation6], 0
    %10 = vsyncpa [#allocation4], 0
    // Predicated region
    $region2: #{tpu_custom_call.1} parent=1 // pred_check
      _
    $region3: #{tpu_custom_call.1} parent=1 // pred_check_branch
      %12 = sbr.rel (0) target = $region5
    $region4: #{tpu_custom_call.1} parent=1 // pred_region
      %s14 = ssub.s32 128, 128
      %15 = vsyncadd [#allocation3], %s14
      %s17 = sshll.u32 [#allocation2], 4
      %s18 = int_to_ptr.vmem [resolvable:$true] %s17
      %20 = dma.hbm_to_vmem [thread:$0]  %s0, 128, %s18, [#allocation3]
    $region5: #{tpu_custom_call.1} parent=1 // pred_fallthru
      _
    // Predicated region
    $region6: #{tpu_custom_call.1} parent=1 // pred_check
      _
    $region7: #{tpu_custom_call.1} parent=1 // pred_check_branch
      %22 = sbr.rel (0) target = $region9
    $region8: #{tpu_custom_call.1} parent=1 // pred_region
      %s24 = ssub.s32 128, 128
      %25 = vsyncadd [#allocation6], %s24
      %s27 = sshll.u32 [#allocation5], 4
      %s28 = int_to_ptr.vmem [resolvable:$true] %s27
      %30 = dma.hbm_to_vmem [thread:$0]  %s1, 128, %s28, [#allocation6]
    $region9: #{tpu_custom_call.1} parent=1 // pred_fallthru
      _
    // Predicated region
    $region10: #{tpu_custom_call.1} parent=1 // pred_check
      _
    $region11: #{tpu_custom_call.1} parent=1 // pred_check_branch
      %32 = sbr.rel (0) target = $region13
    $region12: #{tpu_custom_call.1} parent=1 // pred_region
      %s34 = ssub.s32 256, 256
      %35 = vsyncadd [#allocation6], %s34
      %s36 = sshll.u32 [#allocation7], 4
      %s37 = int_to_ptr.vmem [resolvable:$true] %s36
      %42 = dma.hbm_to_vmem [thread:$0]  %s2, 256, %s37, [#allocation6], 128, 128, 8
    $region13: #{tpu_custom_call.1} parent=1 // pred_fallthru
      _
    // Predicated region
    $region14: #{tpu_custom_call.1} parent=1 // pred_check
      _
    $region15: #{tpu_custom_call.1} parent=1 // pred_check_branch
      %44 = sbr.rel (0) target = $region17
    $region16: #{tpu_custom_call.1} parent=1 // pred_region
      %45 = dma.done [#allocation3], 128
    $region17: #{tpu_custom_call.1} parent=1 // pred_fallthru
      _
    // Predicated region
    $region18: #{tpu_custom_call.1} parent=1 // pred_check
      _
    $region19: #{tpu_custom_call.1} parent=1 // pred_check_branch
      %47 = sbr.rel (0) target = $region21
    $region20: #{tpu_custom_call.1} parent=1 // pred_region
      %48 = dma.done [#allocation6], 128
    $region21: #{tpu_custom_call.1} parent=1 // pred_fallthru
      _
    // Predicated region
    $region22: #{tpu_custom_call.1} parent=1 // pred_check
      _
    $region23: #{tpu_custom_call.1} parent=1 // pred_check_branch
      %50 = sbr.rel (0) target = $region25
    $region24: #{tpu_custom_call.1} parent=1 // pred_region
      %51 = dma.done [#allocation6], 256
    $region25: #{tpu_custom_call.1} parent=1 // pred_fallthru
      _
    %v52 = vld [vmem:[#allocation2] sm:$0xff]
    %54 = vrot.lane.b32.xlu0 %v52, 1
    %v55 = vpop.permute.xlu0 %54
    %vm57 = vcmask 7168
    %v58 = vsel %vm57, 0.0, %v55
    %vm59 = vcmask 138240
    %v60 = vsel %vm59, %v58, 0.0
    %v61 = vld [vmem:[#allocation5] sm:$0xff]
    %63 = vset.pattern.permute.xlu0 0
    %64 = vperm.xlu0 %63, %v61
    %v65 = vpop.permute.xlu0 %64
    %v67 = vmul.f32 %v60, %v65
    %68 = vset.pattern.permute.xlu0 1
    %69 = vperm.xlu0 %68, %v61
    %v70 = vpop.permute.xlu0 %69
    %v72 = vmul.f32 %v60, %v70
    %74 = vrot.lane.b32.xlu0 %v72, 127
    %v75 = vpop.permute.xlu0 %74
    %v77 = vadd.f32 %v67, %v75
    %78 = vset.pattern.permute.xlu0 2
    %79 = vperm.xlu0 %78, %v61
    %v80 = vpop.permute.xlu0 %79
    %v82 = vmul.f32 %v60, %v80
    %84 = vrot.lane.b32.xlu0 %v82, 126
    %v85 = vpop.permute.xlu0 %84
    %v87 = vadd.f32 %v77, %v85
    %v88 = vld [vmem:[#allocation7] sm:$0xff]
    %v89 = vld [vmem:[#allocation7 + $0x8] sm:$0xff]
    %vm90 = vcmask 64512
    %v92 = vsel %vm90, %v88, 0
    %v95 = vsel %vm90, %v89, 0
    %97 = vmatprep.subr.mxu0 0.0
    %98 = vmatpush1.msra.mxu0 %v87
    %99 = vmatprep.subr.mxu0 0.0
    %100 = vmatpush1.msra.mxu0 0.0
    %101 = vmatprep.subr.mxu0 0.0
    %102 = vmatpush1.msra.mxu0 0.0
    %103 = vmatprep.subr.mxu0 0.0
    %104 = vmatpush1.msra.mxu0 0.0
    %105 = vmatprep.subr.mxu0 0.0
    %106 = vmatpush1.msra.mxu0 0.0
    %107 = vmatprep.subr.mxu0 0.0
    %108 = vmatpush1.msra.mxu0 0.0
    %109 = vmatprep.subr.mxu0 0.0
    %110 = vmatpush1.msra.mxu0 0.0
    %111 = vmatprep.subr.mxu0 0.0
    %112 = vmatpush1.msra.mxu0 0.0
    %113 = vmatprep.subr.mxu0 0.0
    %114 = vmatpush1.msra.mxu0 0.0
    %115 = vmatprep.subr.mxu0 0.0
    %116 = vmatpush1.msra.mxu0 0.0
    %117 = vmatprep.subr.mxu0 0.0
    %118 = vmatpush1.msra.mxu0 0.0
    %119 = vmatprep.subr.mxu0 0.0
    %120 = vmatpush1.msra.mxu0 0.0
    %121 = vmatprep.subr.mxu0 0.0
    %122 = vmatpush1.msra.mxu0 0.0
    %123 = vmatprep.subr.mxu0 0.0
    %124 = vmatpush1.msra.mxu0 0.0
    %125 = vmatprep.subr.mxu0 0.0
    %126 = vmatpush1.msra.mxu0 0.0
    %127 = vmatprep.subr.mxu0 0.0
    %128 = vmatpush1.msra.mxu0 0.0
    %129 = vmatprep.subr.mxu0 0.0
    %130 = vmatpush1.msra.mxu0 0.0
    %131 = vmatprep.subr.mxu0 0.0
    %132 = vmatpush1.msra.mxu0 0.0
    %133 = vmatprep.subr.mxu0 0.0
    %134 = vmatpush1.msra.mxu0 0.0
    %135 = vmatprep.subr.mxu0 0.0
    %136 = vmatpush1.msra.mxu0 0.0
    %137 = vmatprep.subr.mxu0 0.0
    %138 = vmatpush1.msra.mxu0 0.0
    %139 = vmatprep.subr.mxu0 0.0
    %140 = vmatpush1.msra.mxu0 0.0
    %141 = vmatprep.subr.mxu0 0.0
    %142 = vmatpush1.msra.mxu0 0.0
    %143 = vmatprep.subr.mxu0 0.0
    %144 = vmatpush1.msra.mxu0 0.0
    %145 = vmatprep.subr.mxu0 0.0
    %146 = vmatpush1.msra.mxu0 0.0
    %147 = vmatprep.subr.mxu0 0.0
    %148 = vmatpush1.msra.mxu0 0.0
    %149 = vmatprep.subr.mxu0 0.0
    %150 = vmatpush1.msra.mxu0 0.0
    %151 = vmatprep.subr.mxu0 0.0
    %152 = vmatpush1.msra.mxu0 0.0
    %153 = vmatprep.subr.mxu0 0.0
    %154 = vmatpush1.msra.mxu0 0.0
    %155 = vmatprep.subr.mxu0 0.0
    %156 = vmatpush1.msra.mxu0 0.0
    %157 = vmatprep.subr.mxu0 0.0
    %158 = vmatpush1.msra.mxu0 0.0
    %159 = vmatprep.subr.mxu0 0.0
    %160 = vmatpush1.msra.mxu0 0.0
    %161 = vmatprep.mubr.f32.mxu0 0.0
    %162 = vmatmul.mubr.f32.gmra.mrb[0].mxu0 %v92
    %v163 = vpop.f32.mrb[0].mxu0
    %v164 = vadd.f32 0.0, %v163
    %v165 = vpop.f32.mrb[0].mxu0
    %166 = vmatprep.mubr.f32.mxu0 0.0
    %167 = vmatmul.mubr.f32.gmra.mrb[0].mxu0 %v95
    %v168 = vpop.f32.mrb[0].mxu0
    %v169 = vadd.f32 0.0, %v168
    %v170 = vpop.f32.mrb[0].mxu0
    %171 = vdwg.mxu0
    %vm172 = vcmask 130048
    %173 = vst.msk [vmem:[#allocation8] sm:$0xff] %vm172, %v164
    %174 = vst.msk [vmem:[#allocation8 + $0x8] sm:$0xff] %vm172, %v169
    // Predicated region
    $region26: #{tpu_custom_call.1} parent=1 // pred_check
      _
    $region27: #{tpu_custom_call.1} parent=1 // pred_check_branch
      %176 = sbr.rel (0) target = $region29
    $region28: #{tpu_custom_call.1} parent=1 // pred_region
      %s178 = ssub.s32 256, 256
      %179 = vsyncadd [#allocation4], %s178
      %s180 = sshll.u32 [#allocation8], 4
      %s181 = int_to_ptr.vmem [resolvable:$true] %s180
      %186 = dma.vmem_to_hbm [thread:$0]  %s181, 256, %s3, [#allocation4], 128, 128, 8
    $region29: #{tpu_custom_call.1} parent=1 // pred_fallthru
      _
    // Predicated region
    $region30: #{tpu_custom_call.1} parent=1 // pred_check
      _
    $region31: #{tpu_custom_call.1} parent=1 // pred_check_branch
      %188 = sbr.rel (0) target = $region33
    $region32: #{tpu_custom_call.1} parent=1 // pred_region
      %189 = dma.done [#allocation4], 256
    $region33: #{tpu_custom_call.1} parent=1 // pred_fallthru
      _
    %190 = vsyncpa [#allocation3], 1
    %191 = vsyncpa [#allocation6], 1
    %192 = vsyncpa [#allocation4], 1

</llo_original>
